<compile_context>
chip_gen: v5e
topology: v5e:2x2
jax: 0.10.0
libtpu: 0.0.40
codegen_flags: <defaults>
</compile_context>

<pallas_src>
import functools

import jax
import jax.numpy as jnp
from jax.experimental import pallas as pl
from jax.experimental.pallas import tpu as pltpu

_LANE = 128
_SUBLANE = 8
_CHUNK_ROWS = 1024                   # in-kernel accumulation chunk (512 KiB f32)
_MAX_BLOCK_ROWS = 8192               # 4 MiB per f32 input buffer per block
_MIN_VMEM_LIMIT = 32 << 20
_MAX_VMEM_LIMIT = 56 << 20           # stay under v7x's 64 MiB physical VMEM


def _round_up(x, m):
    return ((x + m - 1) // m) * m


def _round_down(x, m):
    return (x // m) * m


# ---------------------------------------------------------------------------
# Kernels
# ---------------------------------------------------------------------------
def _mse_partial_kernel(*refs, block_rows, rows, num_blocks, weighted):
    """Per-block partial sums of weight * (pred - target)^2 -> (1, 8, 128) f32.

    Each grid step reduces its (block_rows, 128) tile with a chunked,
    fully-unrolled accumulation into an (8, 128) f32 accumulator (pure VPU
    adds, bounded temporaries) and writes its own output slot, keeping the
    grid axis 'parallel'.  The final tiny cross-lane sum happens in JAX.
    """
    if weighted:
        p_ref, t_ref, w_ref, o_ref = refs
    else:
        p_ref, t_ref, o_ref = refs
        w_ref = None

    def block_sum(valid):
        # `valid` is a *static* Python int: number of real rows in this block.
        acc = jnp.zeros((_SUBLANE, _LANE), jnp.float32)
        r0 = 0
        while r0 < valid:
            ch = min(_CHUNK_ROWS, block_rows - r0,
                     _round_up(valid - r0, _SUBLANE))
            p = p_ref[pl.ds(r0, ch), :].astype(jnp.float32)
            t = t_ref[pl.ds(r0, ch), :].astype(jnp.float32)
            d = p - t
            sq = d * d
            if weighted:
                sq = sq * w_ref[pl.ds(r0, ch), :].astype(jnp.float32)
            if r0 + ch > valid:
                # Only the single chunk that crosses the valid-row boundary of
                # the last (ragged) block pays for iota + compare + select.
                local = r0 + jax.lax.broadcasted_iota(jnp.int32,
                                                      (ch, _LANE), 0)
                sq = jnp.where(local < valid, sq, 0.0)
            # Sublane-aligned reshape (free relayout) + leading-axis sum
            # keeps the reduce as plain vreg adds.
            acc = acc + sq.reshape(ch // _SUBLANE, _SUBLANE, _LANE).sum(axis=0)
            r0 += ch
        return acc.reshape(1, _SUBLANE, _LANE)

    tail = rows % block_rows
    if tail == 0:                               # no ragged block at all
        o_ref[...] = block_sum(block_rows)
    elif num_blocks == 1:                       # single (ragged) block
        o_ref[...] = block_sum(tail)
    else:
        last = num_blocks - 1

        @pl.when(pl.program_id(0) != last)      # full blocks: mask-free
        def _():
            o_ref[...] = block_sum(block_rows)

        @pl.when(pl.program_id(0) == last)      # ragged block: masked tail
        def _():
            o_ref[...] = block_sum(tail)


def _mse_elem_kernel(*refs, loss_weight, weighted):
    """Elementwise loss_weight * weight * (pred - target)^2 ('none').

    Math stays in the native (promoted) input dtype; ragged output rows of the
    last block are dropped by Pallas on writeback, so no masking is needed.
    """
    if weighted:
        p_ref, t_ref, w_ref, o_ref = refs
    else:
        p_ref, t_ref, o_ref = refs

    d = p_ref[...] - t_ref[...]
    res = d * d
    if weighted:
        res = res * w_ref[...]
    if loss_weight != 1.0:
        res = res * loss_weight
    o_ref[...] = res.astype(o_ref.dtype)


# ---------------------------------------------------------------------------
# Wrapper helpers
# ---------------------------------------------------------------------------
def _pick_block_rows(rows, dtype):
    """Largest block <= rows, rounded to the dtype's packed sublane count."""
    pack = max(_SUBLANE, 32 // max(1, jnp.dtype(dtype).itemsize))  # 8/16/32
    if rows >= _MAX_BLOCK_ROWS:
        return _MAX_BLOCK_ROWS
    if rows >= pack:
        return _round_down(rows, pack)
    return _round_down(rows, _SUBLANE)


def _vmem_limit(stream_itemsize_sum, block_rows):
    """Scoped-VMEM limit sized for the double-buffered streams + headroom."""
    bufs = 2 * block_rows * _LANE * stream_itemsize_sum
    return int(min(max(bufs + (12 << 20), _MIN_VMEM_LIMIT), _MAX_VMEM_LIMIT))


def _mse_loss_xla(pred, target, weight, avg_factor, reduction, loss_weight, n):
    """Fused-XLA fallback (single HBM pass) for ragged / tiny inputs.

    TODO(synk): a zero-copy Pallas route for numel % 128 != 0 would need a 1-D
    layout or manual DMA; padding/slicing in HBM costs more than this path.
    """
    d = pred.astype(jnp.float32) - target.astype(jnp.float32)
    loss = d * d
    if weight is not None:
        loss = loss * weight.astype(jnp.float32)
    if reduction == "none":
        return (loss * loss_weight).astype(pred.dtype)
    total = jnp.sum(loss, dtype=jnp.float32)
    if reduction == "sum":
        out = total
    elif avg_factor is None:
        out = total * jnp.float32(1.0 / max(n, 1))
    else:
        out = total / jnp.asarray(avg_factor, jnp.float32)
    return (out * loss_weight).astype(pred.dtype)


# ---------------------------------------------------------------------------
# Public wrapper
# ---------------------------------------------------------------------------
@functools.partial(jax.jit, static_argnames=("reduction", "loss_weight"))
def mse_loss_pallas(pred, target, weight=None, avg_factor=None,
                    reduction="mean", loss_weight=1.0):
    """Equivalent of MSELoss.forward (weighted_loss-wrapped F.mse_loss)."""
    assert reduction in ("none", "mean", "sum")
    if reduction == "sum" and avg_factor is not None:
        raise ValueError('avg_factor can not be used with reduction="sum"')

    orig_shape = pred.shape
    out_dtype = pred.dtype
    n = 1
    for s in orig_shape:
        n *= s

    if weight is not None and tuple(weight.shape) != tuple(orig_shape):
        weight = jnp.broadcast_to(weight, orig_shape)
    weighted = weight is not None
    lw = float(loss_weight)

    # Lane-dense 2-D view of the flat data (free metadata reshape).  Only
    # possible copy-free when numel is a multiple of 128; otherwise (and for
    # tiny inputs) use a single fused XLA pass instead of extra HBM copies.
    rows = n // _LANE
    if n == 0 or n % _LANE != 0 or rows < _SUBLANE:
        return _mse_loss_xla(pred, target, weight, avg_factor, reduction,
                             lw, n)

    inputs = [pred.reshape(rows, _LANE), target.reshape(rows, _LANE)]
    if weighted:
        inputs.append(weight.reshape(rows, _LANE))
    in_itemsize_sum = sum(x.dtype.itemsize for x in inputs)
    in_bytes = in_itemsize_sum * n

    block_rows = _pick_block_rows(rows, pred.dtype)
    num_blocks = -(-rows // block_rows)
    blk = pl.BlockSpec((block_rows, _LANE), lambda i: (i, 0))
    in_specs = [blk] * len(inputs)

    if reduction == "none":
        out_itemsize = jnp.dtype(out_dtype).itemsize
        kernel = functools.partial(_mse_elem_kernel, loss_weight=lw,
                                   weighted=weighted)
        out = pl.pallas_call(
            kernel,
            out_shape=jax.ShapeDtypeStruct((rows, _LANE), out_dtype),
            grid=(num_blocks,),
            in_specs=in_specs,
            out_specs=blk,
            compiler_params=pltpu.CompilerParams(
                dimension_semantics=("parallel",),
                vmem_limit_bytes=_vmem_limit(in_itemsize_sum + out_itemsize,
                                             block_rows)),
            cost_estimate=pl.CostEstimate(
                flops=int(2 + int(weighted) + int(lw != 1.0)) * n,
                transcendentals=0,
                bytes_accessed=int(in_bytes + n * out_itemsize)),
        )(*inputs)
        return out.reshape(orig_shape)          # free: rows * 128 == n

    # 'mean' / 'sum': per-block (8, 128) f32 partials, tiny final sum in JAX.
    kernel = functools.partial(_mse_partial_kernel, block_rows=block_rows,
                               rows=rows, num_blocks=num_blocks,
                               weighted=weighted)
    partials = pl.pallas_call(
        kernel,
        out_shape=jax.ShapeDtypeStruct((num_blocks, _SUBLANE, _LANE),
                                       jnp.float32),
        grid=(num_blocks,),
        in_specs=in_specs,
        out_specs=pl.BlockSpec((1, _SUBLANE, _LANE), lambda i: (i, 0, 0)),
        compiler_params=pltpu.CompilerParams(
            dimension_semantics=("parallel",),
            vmem_limit_bytes=_vmem_limit(in_itemsize_sum, block_rows)),
        cost_estimate=pl.CostEstimate(
            flops=int(3 + int(weighted)) * n,
            transcendentals=0,
            bytes_accessed=int(in_bytes + num_blocks * _SUBLANE * _LANE * 4)),
    )(*inputs)
    total = jnp.sum(partials, dtype=jnp.float32)

    if reduction == "sum":
        loss = total
    elif avg_factor is None:
        loss = total * jnp.float32(1.0 / n)
    else:
        loss = total / jnp.asarray(avg_factor, jnp.float32)
    return (loss * lw).astype(out_dtype)


class MSELoss:
    """JAX/Pallas port of the PyTorch MSELoss module."""

    def __init__(self, reduction="mean", loss_weight=1.0):
        self.reduction = reduction
        self.loss_weight = loss_weight

    def __call__(self, pred, target, weight=None, avg_factor=None,
                 reduction_override=None):
        assert reduction_override in (None, "none", "mean", "sum")
        reduction = reduction_override if reduction_override else self.reduction
        return mse_loss_pallas(pred, target, weight=weight,
                               avg_factor=avg_factor, reduction=reduction,
                               loss_weight=float(self.loss_weight))


# ---------------------------------------------------------------------------
# Demo / self-check
# ---------------------------------------------------------------------------
if __name__ == "__main__":
    key = jax.random.PRNGKey(0)
    k1, k2, k3 = jax.random.split(key, 3)

    B, C, H, W = 2, 4, 16, 16  # NCHW-shaped inputs (layout-agnostic loss)
    pred = jax.random.normal(k1, (B, C, H, W), dtype=jnp.float32)
    target = jax.random.normal(k2, (B, C, H, W), dtype=jnp.float32)
    weight = jax.random.uniform(k3, (B, C, H, W), dtype=jnp.float32)

    loss_mod = MSELoss(reduction="mean", loss_weight=1.0)

    # default: mean reduction, no weight (unweighted specialized kernel)
    out_mean = loss_mod(pred, target)
    jax.block_until_ready(out_mean)
    ref_mean = jnp.mean((pred - target) ** 2)
    assert jnp.allclose(out_mean, ref_mean, rtol=1e-5, atol=1e-6), (out_mean, ref_mean)

    # weighted + avg_factor
    out_af = loss_mod(pred, target, weight=weight, avg_factor=100.0)
    jax.block_until_ready(out_af)
    ref_af = jnp.sum(weight * (pred - target) ** 2) / 100.0
    assert jnp.allclose(out_af, ref_af, rtol=1e-5, atol=1e-6), (out_af, ref_af)

    # sum reduction
    out_sum = loss_mod(pred, target, reduction_override="sum")
    jax.block_until_ready(out_sum)
    ref_sum = jnp.sum((pred - target) ** 2)
    assert jnp.allclose(out_sum, ref_sum, rtol=1e-5, atol=1e-5), (out_sum, ref_sum)

    # none reduction (elementwise, weighted, loss_weight folded in-kernel)
    out_none = loss_mod(pred, target, weight=weight, reduction_override="none")
    jax.block_until_ready(out_none)
    ref_none = weight * (pred - target) ** 2
    assert out_none.shape == pred.shape
    assert jnp.allclose(out_none, ref_none, rtol=1e-5, atol=1e-6)

    # ragged size (not a multiple of 128) exercises the fused-XLA fallback
    p_odd = jax.random.normal(k1, (3, 5, 7), dtype=jnp.float32)
    t_odd = jax.random.normal(k2, (3, 5, 7), dtype=jnp.float32)
    out_odd = loss_mod(p_odd, t_odd)
    jax.block_until_ready(out_odd)
    ref_odd = jnp.mean((p_odd - t_odd) ** 2)
    assert jnp.allclose(out_odd, ref_odd, rtol=1e-5, atol=1e-6), (out_odd, ref_odd)

    out_odd_none = loss_mod(p_odd, t_odd, reduction_override="none")
    jax.block_until_ready(out_odd_none)
    assert out_odd_none.shape == p_odd.shape
    assert jnp.allclose(out_odd_none, (p_odd - t_odd) ** 2, rtol=1e-5, atol=1e-6)

    # larger aligned shape exercising multi-chunk accumulation + ragged block
    p_big = jax.random.normal(k1, (3, 3, 120, 128), dtype=jnp.float32)  # rows=1080
    t_big = jax.random.normal(k2, (3, 3, 120, 128), dtype=jnp.float32)
    out_big = loss_mod(p_big, t_big)
    jax.block_until_ready(out_big)
    ref_big = jnp.mean((p_big - t_big) ** 2)
    assert jnp.allclose(out_big, ref_big, rtol=1e-5, atol=1e-6), (out_big, ref_big)

    print("KERNEL_OK")
</pallas_src>

<mosaic_0001>
module attributes {stable_mosaic.version = 11 : i64} {
  func.func @_mse_partial_kernel(%arg0: i32, %arg1: memref<16x128xf32, #tpu.memory_space<vmem>>, %arg2: memref<16x128xf32, #tpu.memory_space<vmem>>, %arg3: memref<1x8x128xf32, #tpu.memory_space<vmem>>) attributes {dimension_semantics = [#tpu.dimension_semantics<parallel>], iteration_bounds = array<i64: 1>, scalar_prefetch = 0 : i64, scratch_operands = 0 : i64, tpu.core_type = #tpu.core_type<tc>, window_params = [{transform_indices = @transform_0, window_bounds = array<i64: 16, 128>}, {transform_indices = @transform_1, window_bounds = array<i64: 16, 128>}, {transform_indices = @transform_2, window_bounds = array<i64: 1, 8, 128>}]} {
    %cst = arith.constant 0.000000e+00 : f32
    %0 = vector.broadcast %cst : f32 to vector<8x128xf32>
    %c0 = arith.constant 0 : index
    %c0_0 = arith.constant 0 : index
    %1 = vector.load %arg1[%c0, %c0_0] : memref<16x128xf32, #tpu.memory_space<vmem>>, vector<16x128xf32>
    %c0_1 = arith.constant 0 : index
    %c0_2 = arith.constant 0 : index
    %2 = vector.load %arg2[%c0_1, %c0_2] : memref<16x128xf32, #tpu.memory_space<vmem>>, vector<16x128xf32>
    %3 = arith.subf %1, %2 : vector<16x128xf32>
    %4 = arith.mulf %3, %3 : vector<16x128xf32>
    %5 = vector.shape_cast %4 : vector<16x128xf32> to vector<2x8x128xf32>
    %cst_3 = arith.constant dense<0.000000e+00> : vector<8x128xf32>
    %6 = vector.multi_reduction <add>, %5, %cst_3 [0] : vector<2x8x128xf32> to vector<8x128xf32>
    %7 = arith.addf %0, %6 : vector<8x128xf32>
    %8 = vector.shape_cast %7 : vector<8x128xf32> to vector<1x8x128xf32>
    %c0_4 = arith.constant 0 : index
    %c0_5 = arith.constant 0 : index
    %c0_6 = arith.constant 0 : index
    %9 = vector.load %arg3[%c0_4, %c0_5, %c0_6] : memref<1x8x128xf32, #tpu.memory_space<vmem>>, vector<1x8x128xf32>
    tpu.vector_store %arg3[%c0_4, %c0_5, %c0_6], %8 {strides = array<i32>} : memref<1x8x128xf32, #tpu.memory_space<vmem>>, vector<1x8x128xf32>,
    return
  }
  func.func @transform_0(%arg0: i32) -> (i32, i32) {
    %c0_i32 = arith.constant 0 : i32
    %c0_i32_0 = arith.constant 0 : i32
    return %arg0, %c0_i32 : i32, i32
  }
  func.func @transform_1(%arg0: i32) -> (i32, i32) {
    %c0_i32 = arith.constant 0 : i32
    %c0_i32_0 = arith.constant 0 : i32
    return %arg0, %c0_i32 : i32, i32
  }
  func.func @transform_2(%arg0: i32) -> (i32, i32, i32) {
    %c0_i32 = arith.constant 0 : i32
    %c0_i32_0 = arith.constant 0 : i32
    %c0_i32_1 = arith.constant 0 : i32
    return %arg0, %c0_i32, %c0_i32_0 : i32, i32, i32
  }
}

</mosaic_0001>

<llo_original>
// kernel: mse_loss_pallas.1
$region0: #{mse_loss_pallas.1}
  #allocation0 [shape = 'u32[]', space=smem, size = 0x4, offset = 0x4, fixed_abs, tag = 'smem constant byte address 0x4 - core index']
  #allocation1 [shape = 'u32[72,128]{1,0:T(1,128)}', space=vmem, size = 0x9000, scoped, tag = 'internal scratch']
  %s0 = inlined_call_operand.vmem [shape: f32[16,128], index: 0, kind: input, shape index: {}]
  %s1 = inlined_call_operand.vmem [shape: f32[16,128], index: 1, kind: input, shape index: {}]
  %s2 = inlined_call_operand.vmem [shape: f32[1,8,128], index: 2, kind: output, shape index: {}]
  %s3 = sld [smem:[#allocation0]]
  $region18: #{mse_loss_pallas.1} parent=0
    _
  %s5 = ssub.s32 1, %s3
  %s6 = scalar_select 0, %s5, %s3
  // Predicated region
  $region2: #{mse_loss_pallas.1} parent=0 // pred_check
    _
  $region3: #{mse_loss_pallas.1} parent=0 // pred_check_branch
    %8 = sbr.rel (0) target = $region5
  $region4: #{mse_loss_pallas.1} parent=0 // pred_region
    _
  $region5: #{mse_loss_pallas.1} parent=0 // pred_fallthru
    _
  // Predicated region
  $region6: #{mse_loss_pallas.1} parent=0 // pred_check
    _
  $region7: #{mse_loss_pallas.1} parent=0 // pred_check_branch
    %10 = sbr.rel (0) target = $region9
  $region8: #{mse_loss_pallas.1} parent=0 // pred_region
    _
  $region9: #{mse_loss_pallas.1} parent=0 // pred_fallthru
    _
  %v11 = vld [vmem:[%s0] sm:$0xff]
  %v12 = vld [vmem:[%s0 + $0x8] sm:$0xff]
  %v13 = vld [vmem:[%s1] sm:$0xff]
  %v14 = vld [vmem:[%s1 + $0x8] sm:$0xff]
  %v15 = vsub.f32 %v11, %v13
  %v16 = vsub.f32 %v12, %v14
  %v17 = vmul.f32 %v15, %v15
  %v18 = vmul.f32 %v16, %v16
  %v19 = vadd.f32 %v17, %v18
  %v20 = vadd.f32 %v19, 0.0
  %21 = vst [vmem:[%s2] sm:$0xff] %v20
  // Predicated region
  $region10: #{mse_loss_pallas.1} parent=0 // pred_check
    _
  $region11: #{mse_loss_pallas.1} parent=0 // pred_check_branch
    %23 = sbr.rel (0) target = $region13
  $region12: #{mse_loss_pallas.1} parent=0 // pred_region
    _
  $region13: #{mse_loss_pallas.1} parent=0 // pred_fallthru
    _
  // Predicated region
  $region14: #{mse_loss_pallas.1} parent=0 // pred_check
    _
  $region15: #{mse_loss_pallas.1} parent=0 // pred_check_branch
    %25 = sbr.rel (0) target = $region17
  $region16: #{mse_loss_pallas.1} parent=0 // pred_region
    _
  $region17: #{mse_loss_pallas.1} parent=0 // pred_fallthru
    _

</llo_original>
